<compile_context>
chip_gen: v5e
topology: v5e:2x2
jax: 0.10.0
libtpu: 0.0.40
codegen_flags: <defaults>
</compile_context>

<pallas_src>
import functools

import jax
import jax.numpy as jnp
from jax.experimental import pallas as pl
from jax.experimental.pallas import tpu as pltpu

_LANE = 128
# Per-grid-step (input + output, double-buffered) working-set budget.  Leaves
# headroom under v7x's 64 MiB physical VMEM; trivially fine on v5e/v6e.
_VMEM_WORKING_SET_BUDGET = 24 * 1024 * 1024
# Scoped-VMEM limit: safe on every generation (v5e/v6e 128 MiB, v7x 64 MiB).
_VMEM_LIMIT_BYTES = 48 * 1024 * 1024


def _channel_conv_shifted(y, w_ref, ypad_ref, k, pad):
    """Conv1d(1, 1, k, padding=pad, bias=False) along the channel axis.

    y:        (Bt, C, 1) float32 pooled vector (channels on sublanes).
    w_ref:    (k,) float32 conv taps in SMEM.
    ypad_ref: (Bt, C + 2*pad, 1) float32 VMEM scratch; the zero halo makes
              every tap a static shifted slice -> k multiply-adds on the VPU.
    """
    c = y.shape[1]
    if pad > 0:
        ypad_ref[...] = jnp.zeros_like(ypad_ref)      # zero halo
    ypad_ref[:, pad:pad + c, :] = y
    conv = jnp.zeros_like(y)
    for j in range(k):                                # static, unrolled taps
        conv = conv + w_ref[j] * ypad_ref[:, j:j + c, :]
    return conv


# ----------------------------- single-pass path -----------------------------


def _d1block_fused_kernel(w_ref, x_ref, o_ref, ypad_ref, *, k, pad, hw_true):
    x = x_ref[...].astype(jnp.float32)                # (Bt, C, HW_pad)
    hw_pad = x.shape[-1]
    if hw_pad != hw_true:                             # mask lane padding
        lane = jax.lax.broadcasted_iota(jnp.int32, x.shape, dimension=2)
        valid = lane < hw_true
        x_sum = jnp.where(valid, x, 0.0)
        x_max = jnp.where(valid, x, -jnp.inf)
    else:
        x_sum = x
        x_max = x
    mean = jnp.sum(x_sum, axis=-1, keepdims=True) * (1.0 / hw_true)  # (Bt,C,1)
    mx = jnp.max(x_max, axis=-1, keepdims=True)                      # (Bt,C,1)
    y = mean + mx
    conv = _channel_conv_shifted(y, w_ref, ypad_ref, k, pad)
    att = jax.nn.sigmoid(conv)                                       # (Bt,C,1)
    o_ref[...] = (x * att).astype(o_ref.dtype)        # broadcast over lanes


# -------------------------- two-pass fallback path ---------------------------


def _d1block_reduce_kernel(w_ref, x_ref, att_ref, sum_acc, max_acc, ypad_ref,
                           *, k, pad, hw_true, hw_tile):
    h = pl.program_id(1)

    @pl.when(h == 0)
    def _init():
        sum_acc[...] = jnp.zeros_like(sum_acc)
        max_acc[...] = jnp.full_like(max_acc, -jnp.inf)

    x = x_ref[...].astype(jnp.float32)                # (1, C, hw_tile)
    if hw_true % hw_tile != 0:                        # lane padding exists
        lane = jax.lax.broadcasted_iota(jnp.int32, x.shape, dimension=2)
        valid = (lane + h * hw_tile) < hw_true
        x_sum = jnp.where(valid, x, 0.0)
        x_max = jnp.where(valid, x, -jnp.inf)
    else:
        x_sum = x
        x_max = x
    sum_acc[...] = sum_acc[...] + jnp.sum(x_sum, axis=-1, keepdims=True)
    max_acc[...] = jnp.maximum(max_acc[...],
                               jnp.max(x_max, axis=-1, keepdims=True))

    @pl.when(h == pl.num_programs(1) - 1)
    def _finalize():
        y = sum_acc[...] * (1.0 / hw_true) + max_acc[...]
        conv = _channel_conv_shifted(y, w_ref, ypad_ref, k, pad)
        att_ref[...] = jax.nn.sigmoid(conv).astype(att_ref.dtype)


def _d1block_scale_kernel(x_ref, att_ref, o_ref):
    x = x_ref[...].astype(jnp.float32)
    o_ref[...] = (x * att_ref[...]).astype(o_ref.dtype)


# --------------------------------- wrapper -----------------------------------


def _round_up(n, m):
    return ((n + m - 1) // m) * m


def _pick_batch_tile(batch, per_batch_bytes, budget_bytes):
    """Largest divisor of `batch` whose (in+out, double-buffered) slab fits the
    budget; backs off to >=2 grid steps (v7x: 2 TensorCores) unless the
    per-step slab would become tiny (<512 KiB) and step overhead dominate."""
    limit = max(1, budget_bytes // (4 * per_batch_bytes))
    divisors = [d for d in range(1, batch + 1) if batch % d == 0 and d <= limit]
    bt = max(divisors)
    if bt == batch and batch >= 2:
        smaller = [d for d in divisors
                   if d < batch and d * per_batch_bytes >= (512 << 10)]
        if smaller:
            bt = max(smaller)
    return bt


def _pick_hw_tile(hw_pad, channels, itemsize, budget_bytes, max_hw_tile=None):
    """Largest multiple-of-128 divisor of hw_pad whose (in+out, double-buffered)
    slab fits the budget."""
    max_lanes = max(_LANE, budget_bytes // (4 * channels * itemsize))
    if max_hw_tile is not None:
        max_lanes = min(max_lanes, max(_LANE, max_hw_tile))
    tile = _LANE
    t = _LANE
    while t <= hw_pad:
        if hw_pad % t == 0 and t <= max_lanes:
            tile = t
        t += _LANE
    return tile


def d1block_forward(x, conv_weight, *,
                    vmem_budget_bytes=_VMEM_WORKING_SET_BUDGET,
                    force_two_pass=False,
                    _max_hw_tile=None):
    """x: (B, C, H, W).  conv_weight: (k,) = PyTorch Conv1d(1, 1, k).weight[0, 0]."""
    batch, channels, height, width = x.shape
    k = int(conv_weight.shape[0])
    if k % 2 != 1:
        raise ValueError(f"d1block expects an odd Conv1d kernel size, got k={k}")
    pad = (k - 1) // 2
    hw = height * width
    hw_pad = _round_up(hw, _LANE)                     # lane-dense loads/stores
    itemsize = x.dtype.itemsize

    xf = x.reshape(batch, channels, hw)
    if hw_pad != hw:
        xf = jnp.pad(xf, ((0, 0), (0, 0), (0, hw_pad - hw)))
    w32 = conv_weight.astype(jnp.float32)             # k taps -> SMEM

    per_batch_bytes = channels * hw_pad * itemsize
    single_pass_fits = 4 * per_batch_bytes <= vmem_budget_bytes
    w_spec = pl.BlockSpec(memory_space=pltpu.MemorySpace.SMEM)

    if single_pass_fits and not force_two_pass:
        # Fused single pass: whole (Bt, C, HW_pad) slab per grid step.
        bt = _pick_batch_tile(batch, per_batch_bytes, vmem_budget_bytes)
        kern = functools.partial(_d1block_fused_kernel, k=k, pad=pad, hw_true=hw)
        out = pl.pallas_call(
            kern,
            out_shape=jax.ShapeDtypeStruct((batch, channels, hw_pad), x.dtype),
            grid_spec=pltpu.PrefetchScalarGridSpec(
                num_scalar_prefetch=0,
                grid=(batch // bt,),
                in_specs=[
                    w_spec,                                          # (k,) SMEM
                    pl.BlockSpec((bt, channels, hw_pad), lambda b: (b, 0, 0)),
                ],
                out_specs=pl.BlockSpec((bt, channels, hw_pad),
                                       lambda b: (b, 0, 0)),
                scratch_shapes=[
                    pltpu.VMEM((bt, channels + 2 * pad, 1), jnp.float32),
                ],
            ),
            compiler_params=pltpu.CompilerParams(
                dimension_semantics=("parallel",),
                vmem_limit_bytes=_VMEM_LIMIT_BYTES,
            ),
        )(w32, xf)
    else:
        # Two-pass fallback for slabs that do not fit the VMEM budget
        # (costs one extra HBM read of x, so only used when needed).
        hw_tile = _pick_hw_tile(hw_pad, channels, itemsize, vmem_budget_bytes,
                                max_hw_tile=_max_hw_tile)
        n_hw = hw_pad // hw_tile

        # Pass 1: reduce over the HW grid axis -> attention vector (B, C, 1).
        reduce_kern = functools.partial(_d1block_reduce_kernel, k=k, pad=pad,
                                        hw_true=hw, hw_tile=hw_tile)
        att = pl.pallas_call(
            reduce_kern,
            out_shape=jax.ShapeDtypeStruct((batch, channels, 1), jnp.float32),
            grid_spec=pltpu.PrefetchScalarGridSpec(
                num_scalar_prefetch=0,
                grid=(batch, n_hw),                   # reduction axis last
                in_specs=[
                    w_spec,
                    pl.BlockSpec((1, channels, hw_tile), lambda b, h: (b, 0, h)),
                ],
                out_specs=pl.BlockSpec((1, channels, 1), lambda b, h: (b, 0, 0)),
                scratch_shapes=[
                    pltpu.VMEM((1, channels, 1), jnp.float32),            # sum
                    pltpu.VMEM((1, channels, 1), jnp.float32),            # max
                    pltpu.VMEM((1, channels + 2 * pad, 1), jnp.float32),  # halo
                ],
            ),
            compiler_params=pltpu.CompilerParams(
                dimension_semantics=("parallel", "arbitrary"),
                vmem_limit_bytes=_VMEM_LIMIT_BYTES,
            ),
        )(w32, xf)

        # Pass 2: pure elementwise rescale, HW tiled, fully parallel.
        out = pl.pallas_call(
            _d1block_scale_kernel,
            out_shape=jax.ShapeDtypeStruct((batch, channels, hw_pad), x.dtype),
            grid_spec=pltpu.PrefetchScalarGridSpec(
                num_scalar_prefetch=0,
                grid=(batch, n_hw),
                in_specs=[
                    pl.BlockSpec((1, channels, hw_tile), lambda b, h: (b, 0, h)),
                    pl.BlockSpec((1, channels, 1), lambda b, h: (b, 0, 0)),
                ],
                out_specs=pl.BlockSpec((1, channels, hw_tile),
                                       lambda b, h: (b, 0, h)),
            ),
            compiler_params=pltpu.CompilerParams(
                dimension_semantics=("parallel", "parallel"),
                vmem_limit_bytes=_VMEM_LIMIT_BYTES,
            ),
        )(xf, att)

    if hw_pad != hw:
        out = out[..., :hw]
    return out.reshape(batch, channels, height, width)


# -------------------------------- reference ----------------------------------


def _reference(x, conv_weight):
    batch, channels, height, width = x.shape
    k = conv_weight.shape[0]
    pad = (k - 1) // 2
    y = jnp.mean(x, axis=(2, 3)) + jnp.max(x, axis=(2, 3))      # (B, C)
    yp = jnp.pad(y, ((0, 0), (pad, pad)))
    conv = jnp.zeros_like(y)
    for j in range(k):
        conv = conv + conv_weight[j] * yp[:, j:j + channels]
    att = jax.nn.sigmoid(conv)
    return x * att[:, :, None, None]


if __name__ == "__main__":
    key = jax.random.PRNGKey(0)
    kx1, kx2, kx3, kw = jax.random.split(key, 4)

    k_size = 3
    bound = 1.0 / (1 * k_size) ** 0.5       # PyTorch Conv1d default init bound
    conv_weight = jax.random.uniform(kw, (k_size,), dtype=jnp.float32,
                                     minval=-bound, maxval=bound)

    # 1) Small shape -> fused single-pass kernel with batch folding (Bt=2).
    x1 = jax.random.normal(kx1, (2, 4, 16, 16), dtype=jnp.float32)
    o1 = jax.block_until_ready(d1block_forward(x1, conv_weight))
    assert o1.shape == x1.shape
    assert jnp.allclose(o1, _reference(x1, conv_weight), atol=1e-5, rtol=1e-5)

    # 2) H*W not a multiple of 128 -> lane padding + in-kernel masking.
    x2 = jax.random.normal(kx2, (2, 4, 10, 10), dtype=jnp.float32)
    o2 = jax.block_until_ready(d1block_forward(x2, conv_weight))
    assert jnp.allclose(o2, _reference(x2, conv_weight), atol=1e-5, rtol=1e-5)

    # 3) Exercise the two-pass (reduce + rescale) fallback used when the
    #    per-batch slab would not fit the VMEM budget (forced here).
    x3 = jax.random.normal(kx3, (2, 8, 18, 18), dtype=jnp.float32)
    o3 = jax.block_until_ready(
        d1block_forward(x3, conv_weight, force_two_pass=True, _max_hw_tile=128))
    assert jnp.allclose(o3, _reference(x3, conv_weight), atol=1e-5, rtol=1e-5)

    print("KERNEL_OK")
</pallas_src>

<mosaic_0001>
module attributes {stable_mosaic.version = 11 : i64} {
  func.func @_d1block_fused_kernel(%arg0: i32, %arg1: memref<3xf32, #tpu.memory_space<smem>>, %arg2: memref<2x4x256xf32, #tpu.memory_space<vmem>>, %arg3: memref<2x4x256xf32, #tpu.memory_space<vmem>>, %arg4: memref<2x6x1xf32, #tpu.memory_space<vmem>>) attributes {dimension_semantics = [#tpu.dimension_semantics<parallel>], iteration_bounds = array<i64: 1>, scalar_prefetch = 0 : i64, scratch_operands = 1 : i64, tpu.core_type = #tpu.core_type<tc>, window_params = [{transform_indices = @transform_0, window_bounds = array<i64: 3>}, {transform_indices = @transform_1, window_bounds = array<i64: 2, 4, 256>}, {transform_indices = @transform_2, window_bounds = array<i64: 2, 4, 256>}]} {
    %c0 = arith.constant 0 : index
    %c0_0 = arith.constant 0 : index
    %c0_1 = arith.constant 0 : index
    %0 = vector.load %arg2[%c0, %c0_0, %c0_1] : memref<2x4x256xf32, #tpu.memory_space<vmem>>, vector<2x4x256xf32>
    %cst = arith.constant dense<0.000000e+00> : vector<2x4xf32>
    %1 = vector.multi_reduction <add>, %0, %cst [2] : vector<2x4x256xf32> to vector<2x4xf32>
    %2 = vector.shape_cast %1 : vector<2x4xf32> to vector<2x4x1xf32>
    %cst_2 = arith.constant 3.906250e-03 : f32
    %3 = vector.broadcast %cst_2 : f32 to vector<2x4x1xf32>
    %4 = arith.mulf %2, %3 : vector<2x4x1xf32>
    %cst_3 = arith.constant dense<0xFF800000> : vector<2x4xf32>
    %5 = vector.multi_reduction <maximumf>, %0, %cst_3 [2] : vector<2x4x256xf32> to vector<2x4xf32>
    %6 = vector.shape_cast %5 : vector<2x4xf32> to vector<2x4x1xf32>
    %7 = arith.addf %4, %6 : vector<2x4x1xf32>
    %cst_4 = arith.constant 0.000000e+00 : f32
    %8 = vector.broadcast %cst_4 : f32 to vector<2x6x1xf32>
    %c0_5 = arith.constant 0 : index
    %c0_6 = arith.constant 0 : index
    %c0_7 = arith.constant 0 : index
    %9 = vector.load %arg4[%c0_5, %c0_6, %c0_7] : memref<2x6x1xf32, #tpu.memory_space<vmem>>, vector<2x6x1xf32>
    tpu.vector_store %arg4[%c0_5, %c0_6, %c0_7], %8 {strides = array<i32>} : memref<2x6x1xf32, #tpu.memory_space<vmem>>, vector<2x6x1xf32>,
    %c0_8 = arith.constant 0 : index
    %c1 = arith.constant 1 : index
    %c0_9 = arith.constant 0 : index
    %10 = vector.load %arg4[%c0_8, %c1, %c0_9] : memref<2x6x1xf32, #tpu.memory_space<vmem>>, vector<2x4x1xf32>
    tpu.vector_store %arg4[%c0_8, %c1, %c0_9], %7 {strides = array<i32>} : memref<2x6x1xf32, #tpu.memory_space<vmem>>, vector<2x4x1xf32>,
    %cst_10 = arith.constant 0.000000e+00 : f32
    %11 = vector.broadcast %cst_10 : f32 to vector<2x4x1xf32>
    %c0_11 = arith.constant 0 : index
    %12 = memref.load %arg1[%c0_11] : memref<3xf32, #tpu.memory_space<smem>>
    %c0_12 = arith.constant 0 : index
    %c0_13 = arith.constant 0 : index
    %c0_14 = arith.constant 0 : index
    %13 = vector.load %arg4[%c0_12, %c0_13, %c0_14] : memref<2x6x1xf32, #tpu.memory_space<vmem>>, vector<2x4x1xf32>
    %14 = vector.broadcast %12 : f32 to vector<2x4x1xf32>
    %15 = arith.mulf %14, %13 : vector<2x4x1xf32>
    %16 = arith.addf %11, %15 : vector<2x4x1xf32>
    %c1_15 = arith.constant 1 : index
    %17 = memref.load %arg1[%c1_15] : memref<3xf32, #tpu.memory_space<smem>>
    %c0_16 = arith.constant 0 : index
    %c1_17 = arith.constant 1 : index
    %c0_18 = arith.constant 0 : index
    %18 = vector.load %arg4[%c0_16, %c1_17, %c0_18] : memref<2x6x1xf32, #tpu.memory_space<vmem>>, vector<2x4x1xf32>
    %19 = vector.broadcast %17 : f32 to vector<2x4x1xf32>
    %20 = arith.mulf %19, %18 : vector<2x4x1xf32>
    %21 = arith.addf %16, %20 : vector<2x4x1xf32>
    %c2 = arith.constant 2 : index
    %22 = memref.load %arg1[%c2] : memref<3xf32, #tpu.memory_space<smem>>
    %c0_19 = arith.constant 0 : index
    %c2_20 = arith.constant 2 : index
    %c0_21 = arith.constant 0 : index
    %23 = vector.load %arg4[%c0_19, %c2_20, %c0_21] : memref<2x6x1xf32, #tpu.memory_space<vmem>>, vector<2x4x1xf32>
    %24 = vector.broadcast %22 : f32 to vector<2x4x1xf32>
    %25 = arith.mulf %24, %23 : vector<2x4x1xf32>
    %26 = arith.addf %21, %25 : vector<2x4x1xf32>
    %27 = arith.negf %26 : vector<2x4x1xf32>
    %28 = math.exp %27 : vector<2x4x1xf32>
    %cst_22 = arith.constant 1.000000e+00 : f32
    %29 = vector.broadcast %cst_22 : f32 to vector<2x4x1xf32>
    %30 = arith.addf %29, %28 : vector<2x4x1xf32>
    %31 = arith.divf %29, %30 : vector<2x4x1xf32>
    %32 = vector.broadcast %31 : vector<2x4x1xf32> to vector<2x4x256xf32>
    %33 = arith.mulf %0, %32 : vector<2x4x256xf32>
    %c0_23 = arith.constant 0 : index
    %c0_24 = arith.constant 0 : index
    %c0_25 = arith.constant 0 : index
    %34 = vector.load %arg3[%c0_23, %c0_24, %c0_25] : memref<2x4x256xf32, #tpu.memory_space<vmem>>, vector<2x4x256xf32>
    tpu.vector_store %arg3[%c0_23, %c0_24, %c0_25], %33 {strides = array<i32>} : memref<2x4x256xf32, #tpu.memory_space<vmem>>, vector<2x4x256xf32>,
    return
  }
  func.func @transform_0(%arg0: i32) -> i32 {
    %c0_i32 = arith.constant 0 : i32
    %c0_i32_0 = arith.constant 0 : i32
    return %c0_i32 : i32
  }
  func.func @transform_1(%arg0: i32) -> (i32, i32, i32) {
    %c0_i32 = arith.constant 0 : i32
    %c0_i32_0 = arith.constant 0 : i32
    %c0_i32_1 = arith.constant 0 : i32
    return %arg0, %c0_i32, %c0_i32_0 : i32, i32, i32
  }
  func.func @transform_2(%arg0: i32) -> (i32, i32, i32) {
    %c0_i32 = arith.constant 0 : i32
    %c0_i32_0 = arith.constant 0 : i32
    %c0_i32_1 = arith.constant 0 : i32
    return %arg0, %c0_i32, %c0_i32_0 : i32, i32, i32
  }
}

</mosaic_0001>

<llo_original>
// kernel: tpu_custom_call.1
$region0: #{tpu_custom_call.1}
  #allocation0 [shape = 'u32[]', space=smem, size = 0x4, offset = 0x4, fixed_abs, tag = 'smem constant byte address 0x4 - core index']
  #allocation1 [shape = 'u32[72,128]{1,0:T(1,128)}', space=vmem, size = 0x9000, scoped, tag = 'internal scratch']
  #allocation2 [shape = 'f32[2,6,1]{2,1,0:T(8,128)}', space=vmem, size = 0x2000, scoped, tag = 'scratch operand']
  %s0 = inlined_call_operand.hbm [shape: f32[3], index: 0, kind: input, shape index: {}]
  %s1 = inlined_call_operand.hbm [shape: f32[2,4,256], index: 1, kind: input, shape index: {}]
  %s2 = inlined_call_operand.hbm [shape: f32[2,4,256], index: 2, kind: output, shape index: {}]
  %s3 = sld [smem:[#allocation0]]
  $region26: #{tpu_custom_call.1} parent=0
    _
  %s5 = ssub.s32 1, %s3
  %s6 = scalar_select 0, %s5, %s3
  $region1: #{tpu_custom_call.1} parent=0
    #allocation3 [shape = 'u8[512]{0}', space=smem, size = 0x200, scoped, tag = 'input window, operand 0, single buffered']
    #allocation4 [shape = 's32[1]{0}', space=sflag, size = 0x4, scoped, tag = 'scoped memory for tpu_custom_call.1']
    #allocation5 [shape = 's32[1]{0}', space=sflag, size = 0x4, scoped, tag = 'scoped memory for tpu_custom_call.1']
    #allocation6 [shape = 's32[1]{0}', space=sflag, size = 0x4, scoped, tag = 'scoped memory for tpu_custom_call.1']
    #allocation7 [shape = 'u8[8192]{0}', space=vmem, size = 0x2000, scoped, tag = 'input window, operand 1, single buffered']
    #allocation8 [shape = 'u8[8192]{0}', space=vmem, size = 0x2000, scoped, tag = 'output window, operand 0, single buffered']
    %7 = vsyncpa [#allocation6], 0
    %8 = vsyncpa [#allocation4], 0
    %9 = vsyncpa [#allocation5], 0
    // Predicated region
    $region2: #{tpu_custom_call.1} parent=1 // pred_check
      _
    $region3: #{tpu_custom_call.1} parent=1 // pred_check_branch
      %11 = sbr.rel (0) target = $region5
    $region4: #{tpu_custom_call.1} parent=1 // pred_region
      %13 = vsyncadd [#allocation6], 0
      %s15 = sshll.u32 %s0, 4
      %s16 = int_to_ptr.hbm [resolvable:$true] %s15
      %18 = dma.hbm_to_smem %s16, 16, [#allocation3], [#allocation6]
    $region5: #{tpu_custom_call.1} parent=1 // pred_fallthru
      _
    // Predicated region
    $region6: #{tpu_custom_call.1} parent=1 // pred_check
      _
    $region7: #{tpu_custom_call.1} parent=1 // pred_check_branch
      %20 = sbr.rel (0) target = $region9
    $region8: #{tpu_custom_call.1} parent=1 // pred_region
      %22 = vsyncadd [#allocation4], 0
      %s23 = sshll.u32 %s1, 4
      %s24 = int_to_ptr.hbm [resolvable:$true] %s23
      %s25 = sshll.u32 [#allocation7], 4
      %s26 = int_to_ptr.vmem [resolvable:$true] %s25
      %31 = dma.hbm_to_vmem [thread:$0]  %s24, 256, %s26, [#allocation4], 128, 128, 8
    $region9: #{tpu_custom_call.1} parent=1 // pred_fallthru
      _
    // Predicated region
    $region10: #{tpu_custom_call.1} parent=1 // pred_check
      _
    $region11: #{tpu_custom_call.1} parent=1 // pred_check_branch
      %33 = sbr.rel (0) target = $region13
    $region12: #{tpu_custom_call.1} parent=1 // pred_region
      %35 = dma.done [#allocation6], 16
    $region13: #{tpu_custom_call.1} parent=1 // pred_fallthru
      _
    // Predicated region
    $region14: #{tpu_custom_call.1} parent=1 // pred_check
      _
    $region15: #{tpu_custom_call.1} parent=1 // pred_check_branch
      %37 = sbr.rel (0) target = $region17
    $region16: #{tpu_custom_call.1} parent=1 // pred_region
      %39 = dma.done [#allocation4], 256
    $region17: #{tpu_custom_call.1} parent=1 // pred_fallthru
      _
    %40 = sfence
    %v41 = vld [vmem:[#allocation7] sm:$0xff]
    %v42 = vld [vmem:[#allocation7 + $0x8] sm:$0xff]
    %45 = vst [vmem:[#allocation1] ss:$2 sm:$0xff] %v41
    %v46 = vld.sshfl [vmem:[#allocation1] sm:$0xff pattern:$0x75316420]
    %v47 = vld.sshfl [vmem:[#allocation1 + $0x8] sm:$0xff pattern:$0x75316420]
    %s48 = scalar_lea.vmem [#allocation1], 16
    %49 = vst [vmem:[%s48] ss:$2 sm:$0xff] %v42
    %v50 = vld.sshfl [vmem:[#allocation1 + $0x10] sm:$0xff pattern:$0x75316420]
    %v51 = vld.sshfl [vmem:[#allocation1 + $0x18] sm:$0xff pattern:$0x75316420]
    %vm56 = vcmask 1043456
    %v57 = vsel %vm56, %v46, 0.0
    %v58 = vsel %vm56, %v47, 0.0
    %v59 = vadd.f32 %v57, %v58
    %60 = vadd.xlane.f32.xlu0 %v59
    %v61 = vpop.xlane.xlu0 %60
    %v62 = vsel %vm56, %v50, 0.0
    %v63 = vsel %vm56, %v51, 0.0
    %v64 = vadd.f32 %v62, %v63
    %65 = vadd.xlane.f32.xlu0 %v64
    %v66 = vpop.xlane.xlu0 %65
    %v67 = vmul.f32 %v61, 0.00390625
    %v68 = vmul.f32 %v66, 0.00390625
    %69 = vst [vmem:[#allocation1] ss:$2 sm:$0xff] %v41
    %v70 = vld.sshfl [vmem:[#allocation1] sm:$0xff pattern:$0x75316420]
    %v71 = vld.sshfl [vmem:[#allocation1 + $0x8] sm:$0xff pattern:$0x75316420]
    %s72 = scalar_lea.vmem [#allocation1], 16
    %73 = vst [vmem:[%s72] ss:$2 sm:$0xff] %v42
    %v74 = vld.sshfl [vmem:[#allocation1 + $0x10] sm:$0xff pattern:$0x75316420]
    %v75 = vld.sshfl [vmem:[#allocation1 + $0x18] sm:$0xff pattern:$0x75316420]
    %v80 = vsel %vm56, %v70, -inf
    %v81 = vsel %vm56, %v71, -inf
    %v82 = vmax.f32 %v80, %v81
    %83 = vmax.xlane.f32.xlu0 %v82
    %v84 = vpop.xlane.xlu0 %83
    %v85 = vsel %vm56, %v74, -inf
    %v86 = vsel %vm56, %v75, -inf
    %v87 = vmax.f32 %v85, %v86
    %88 = vmax.xlane.f32.xlu0 %v87
    %v89 = vpop.xlane.xlu0 %88
    %v90 = vadd.f32 %v67, %v84
    %v91 = vadd.f32 %v68, %v89
    %vm92 = vcmask 5120
    %93 = vst.msk [vmem:[#allocation2] sm:$0x3f] %vm92, 0.0
    %94 = vst.msk [vmem:[#allocation2 + $0x8] sm:$0x3f] %vm92, 0.0
    %vm95 = vcmask 3072
    %96 = vst.msk [vmem:[#allocation2 + $0x1] sm:$0xf] %vm95, %v90
    %97 = vst.msk [vmem:[#allocation2 + $0x9] sm:$0xf] %vm95, %v91
    %s98 = sld [smem:[#allocation3]]
    %v99 = vld [vmem:[#allocation2] sm:$0xf]
    %v100 = vld [vmem:[#allocation2 + $0x8] sm:$0xf]
    %v101 = vstv %s98
    %v102 = vmul.f32 %v101, %v99
    %v103 = vmul.f32 %v101, %v100
    %v104 = vadd.f32 %v102, 0.0
    %v105 = vadd.f32 %v103, 0.0
    %s106 = sld [smem:[#allocation3 + $0x1]]
    %v107 = vld [vmem:[#allocation2 + $0x1] sm:$0xf]
    %v108 = vld [vmem:[#allocation2 + $0x9] sm:$0xf]
    %v109 = vstv %s106
    %v110 = vmul.f32 %v109, %v107
    %v111 = vmul.f32 %v109, %v108
    %v112 = vadd.f32 %v104, %v110
    %v113 = vadd.f32 %v105, %v111
    %s114 = sld [smem:[#allocation3 + $0x2]]
    %v115 = vld [vmem:[#allocation2 + $0x2] sm:$0xf]
    %v116 = vld [vmem:[#allocation2 + $0xa] sm:$0xf]
    %v117 = vstv %s114
    %v118 = vmul.f32 %v117, %v115
    %v119 = vmul.f32 %v117, %v116
    %v120 = vadd.f32 %v112, %v118
    %v121 = vadd.f32 %v113, %v119
    %v122 = vxor.u32 %v120, 2147483648
    %v123 = vxor.u32 %v121, 2147483648
    %v124 = vmul.f32 %v122, 1.442695
    %v125 = vpow.pop %v124
    %v126 = vmul.f32 %v123, 1.442695
    %v127 = vpow.pop %v126
    %v128 = vadd.f32 %v125, 1.0
    %v129 = vadd.f32 %v127, 1.0
    %v130 = vrcp.pop %v128
    %v131 = vmul.f32 %v128, %v130
    %v132 = vsub.f32 1.0, %v131
    %v133 = vmul.f32 %v130, %v132
    %v134 = vadd.f32 %v130, %v133
    %vm135 = vweird.f32 %v128
    %vm136 = vweird.f32 %v130
    %vm137 = vmor %vm135, %vm136
    %v138 = vsel %vm137, %v130, %v134
    %v139 = vand.u32 2147483647, %v128
    %vm140 = vcmp.eq.f32.partialorder %v139, 8.507059e+37
    %v141 = vand.u32 %v128, 2147483648
    %v142 = vor.u32 1.1754944e-38, %v141
    %v143 = vsel %vm140, %v142, %v138
    %v144 = vmul.f32 1.0, %v143
    %v145 = vrcp.pop %v129
    %v146 = vmul.f32 %v129, %v145
    %v147 = vsub.f32 1.0, %v146
    %v148 = vmul.f32 %v145, %v147
    %v149 = vadd.f32 %v145, %v148
    %vm150 = vweird.f32 %v129
    %vm151 = vweird.f32 %v145
    %vm152 = vmor %vm150, %vm151
    %v153 = vsel %vm152, %v145, %v149
    %v154 = vand.u32 2147483647, %v129
    %vm155 = vcmp.eq.f32.partialorder %v154, 8.507059e+37
    %v156 = vand.u32 %v129, 2147483648
    %v157 = vor.u32 1.1754944e-38, %v156
    %v158 = vsel %vm155, %v157, %v153
    %v159 = vmul.f32 1.0, %v158
    %161 = vset.pattern.permute.xlu0 0
    %162 = vperm.xlu0 %161, %v144
    %v163 = vpop.permute.xlu0 %162
    %165 = vset.pattern.permute.xlu0 0
    %166 = vperm.xlu0 %165, %v159
    %v167 = vpop.permute.xlu0 %166
    %v169 = vunpack.c.l.s4 839922192
    %v170 = vunpack.c.0.s8 %v169
    %v171 = vperm.slane %v163, %v170
    %v173 = vunpack.c.l.s4 839922192
    %v174 = vunpack.c.0.s8 %v173
    %v175 = vperm.slane %v167, %v174
    %v178 = vmul.f32 %v41, %v171
    %v179 = vmul.f32 %v42, %v175
    %180 = vst [vmem:[#allocation8] sm:$0xff] %v178
    %181 = vst [vmem:[#allocation8 + $0x8] sm:$0xff] %v179
    // Predicated region
    $region18: #{tpu_custom_call.1} parent=1 // pred_check
      _
    $region19: #{tpu_custom_call.1} parent=1 // pred_check_branch
      %183 = sbr.rel (0) target = $region21
    $region20: #{tpu_custom_call.1} parent=1 // pred_region
      %185 = vsyncadd [#allocation5], 0
      %s186 = sshll.u32 [#allocation8], 4
      %s187 = int_to_ptr.vmem [resolvable:$true] %s186
      %s188 = sshll.u32 %s2, 4
      %s189 = int_to_ptr.hbm [resolvable:$true] %s188
      %194 = dma.vmem_to_hbm [thread:$0]  %s187, 256, %s189, [#allocation5], 128, 128, 8
    $region21: #{tpu_custom_call.1} parent=1 // pred_fallthru
      _
    // Predicated region
    $region22: #{tpu_custom_call.1} parent=1 // pred_check
      _
    $region23: #{tpu_custom_call.1} parent=1 // pred_check_branch
      %196 = sbr.rel (0) target = $region25
    $region24: #{tpu_custom_call.1} parent=1 // pred_region
      %198 = dma.done [#allocation5], 256
    $region25: #{tpu_custom_call.1} parent=1 // pred_fallthru
      _
    %199 = vsyncpa [#allocation4], 1
    %200 = vsyncpa [#allocation5], 1
    %201 = vsyncpa [#allocation6], 1

</llo_original>
